<compile_context>
chip_gen: v7x
topology: tpu7x:2x2x1
jax: 0.10.0
libtpu: 0.0.40
codegen_flags: <defaults>
</compile_context>

<pallas_src>
import jax
import jax.numpy as jnp
from jax.experimental import pallas as pl
from jax.experimental.pallas import tpu as pltpu

BN_EPS = 1e-5


# --------------------------------------------------------------------------- #
# Pass A: conv (kept in registers/VMEM only) + per-lane sum / sum-of-squares.
# Grid = (G, S): G core-parallel groups, S accumulation steps per group.
# --------------------------------------------------------------------------- #
def _stats_kernel(x3_ref, w_ref, sum_ref, ssq_ref):
    # x3_ref : (B*H, 3*(W+2)*Cin)  bf16   dy taps folded into K
    # w_ref  : (3*(W+2)*Cin, W*Cout) bf16 banded weights
    # sum_ref/ssq_ref : (1, 8, W*Cout) f32 per-group accumulators (resident
    #                   across the "arbitrary" axis s)
    s = pl.program_id(1)

    @pl.when(s == 0)
    def _init():
        sum_ref[...] = jnp.zeros_like(sum_ref)
        ssq_ref[...] = jnp.zeros_like(ssq_ref)

    acc = jnp.dot(x3_ref[...], w_ref[...], preferred_element_type=jnp.float32)
    M, WC = acc.shape
    if M % 8 == 0:
        # Partial-reduce keeping 8 sublanes: pure VPU vreg adds, no cross-sublane
        # XLU work in the hot loop.  Final folds happen once in the epilogue.
        a3 = acc.reshape(M // 8, 8, WC)
        sum_ref[...] += jnp.sum(a3, axis=0)[None]
        ssq_ref[...] += jnp.sum(a3 * a3, axis=0)[None]
    else:  # robustness fallback (not hit at the demo shape)
        sum_ref[0:1, 0:1, :] = (sum_ref[0:1, 0:1, :]
                                + jnp.sum(acc, axis=0, keepdims=True)[None])
        ssq_ref[0:1, 0:1, :] = (ssq_ref[0:1, 0:1, :]
                                + jnp.sum(acc * acc, axis=0, keepdims=True)[None])


# --------------------------------------------------------------------------- #
# Pass B: recompute conv fused with BN affine + ReLU (no HBM intermediate).
# --------------------------------------------------------------------------- #
def _conv_bn_relu_kernel(x3_ref, w_ref, scale_ref, shift_ref, o_ref):
    acc = jnp.dot(x3_ref[...], w_ref[...], preferred_element_type=jnp.float32)
    o_ref[...] = jnp.maximum(acc * scale_ref[...] + shift_ref[...], 0.0)


# --------------------------------------------------------------------------- #
# Wrapper-side layout plumbing
# --------------------------------------------------------------------------- #
def _make_banded_weights(w_oihw, W):
    """(Cout,Cin,3,3) -> (3*(W+2)*Cin, W*Cout) banded matrix (dy folded into K)."""
    Cout, Cin, KH, KW = w_oihw.shape
    Win = W + 2
    wk = jnp.transpose(w_oihw, (2, 3, 1, 0)).astype(jnp.float32)  # (dy, dx, Cin, Cout)
    xw = jnp.arange(Win)[:, None]
    xo = jnp.arange(W)[None, :]
    band = jnp.zeros((KH, Win, Cin, W, Cout), jnp.float32)
    for dx in range(KW):
        ind = (xw == xo + dx).astype(jnp.float32)                 # (Win, W)
        band = band + (ind[None, :, None, :, None]
                       * wk[:, dx][:, None, :, None, :])
    return band.reshape(KH * Win * Cin, W * Cout)


def _choose_batching(N, H, target_rows=256):
    """Images per grid step (B), core groups (G), steps per group (S)."""
    b_cap = max(1, target_rows // max(H, 1))
    cands = [d for d in range(1, N + 1) if N % d == 0 and d <= b_cap]
    good = [d for d in cands if (d * H) % 8 == 0]   # keep sublane tiling aligned
    B = max(good) if good else max(cands)
    nblk = N // B
    G = 2 if nblk % 2 == 0 else 1                   # feed both v7x TensorCores
    S = nblk // G
    return B, G, S


def conv_block(x_nchw, w_oihw, bias, gamma, beta):
    """ConvBlock forward (training-mode BatchNorm). x: (N,Cin,H,W) -> (N,Cout,H,W).

    `bias` is accepted for API parity with nn.Conv2d but unused: a conv bias
    feeding training-mode BatchNorm cancels exactly (shifts the batch mean,
    leaves the variance unchanged), so the output is identical without it.
    """
    del bias
    N, Cin, H, W = x_nchw.shape
    Cout = w_oihw.shape[0]
    Hp, Wp = H + 2, W + 2
    WC = W * Cout
    K3 = 3 * Wp * Cin

    # NCHW -> padded NHWC, pack channels into lanes, fold the 3 dy taps into K:
    #   x3[n*H + h, :] = concat(xpad[n, h], xpad[n, h+1], xpad[n, h+2])
    x_nhwc = jnp.transpose(x_nchw, (0, 2, 3, 1))
    xp = jnp.pad(x_nhwc, ((0, 0), (1, 1), (1, 1), (0, 0)))
    xp = xp.reshape(N, Hp, Wp * Cin).astype(jnp.bfloat16)
    x3 = jnp.concatenate([xp[:, 0:H], xp[:, 1:H + 1], xp[:, 2:H + 2]], axis=-1)
    x3 = x3.reshape(N * H, K3)

    w_flat = _make_banded_weights(w_oihw, W).astype(jnp.bfloat16)   # (K3, WC)

    B, G, S = _choose_batching(N, H)
    MB = B * H                                   # MXU M rows per grid step

    def x3_index_a(g, s):
        return (g * S + s, 0)

    # ---- Pass A: stats only (no conv intermediate written to HBM) ----------
    sums, ssqs = pl.pallas_call(
        _stats_kernel,
        out_shape=(jax.ShapeDtypeStruct((G, 8, WC), jnp.float32),
                   jax.ShapeDtypeStruct((G, 8, WC), jnp.float32)),
        grid=(G, S),
        in_specs=[
            pl.BlockSpec((MB, K3), x3_index_a),
            pl.BlockSpec((K3, WC), lambda g, s: (0, 0)),
        ],
        out_specs=(
            pl.BlockSpec((1, 8, WC), lambda g, s: (g, 0, 0)),
            pl.BlockSpec((1, 8, WC), lambda g, s: (g, 0, 0)),
        ),
        compiler_params=pltpu.CompilerParams(
            dimension_semantics=("parallel", "arbitrary")),
    )(x3, w_flat)

    # Tiny epilogue (few hundred elements): fold core groups / sublanes /
    # W lane-groups -> per-channel stats, fuse BN into one (scale, shift) pair
    # tiled to the lane packing used by Pass B.
    # TODO(synk): E[x^2]-E[x]^2 can cancel at very large N*H*W; use Welford there.
    inv_count = 1.0 / float(N * H * W)
    ch_sum = jnp.sum(sums, axis=(0, 1)).reshape(W, Cout).sum(axis=0)   # (Cout,)
    ch_ssq = jnp.sum(ssqs, axis=(0, 1)).reshape(W, Cout).sum(axis=0)
    mean = ch_sum * inv_count
    var = ch_ssq * inv_count - mean * mean          # biased var (BN training mode)
    scale_c = gamma.astype(jnp.float32) * jax.lax.rsqrt(var + BN_EPS)
    shift_c = beta.astype(jnp.float32) - mean * scale_c
    scale_t = jnp.tile(scale_c, W).reshape(1, WC)   # matches w*Cout + c lane order
    shift_t = jnp.tile(shift_c, W).reshape(1, WC)

    # ---- Pass B: conv recompute fused with BN affine + ReLU ----------------
    y_flat = pl.pallas_call(
        _conv_bn_relu_kernel,
        out_shape=jax.ShapeDtypeStruct((N * H, WC), jnp.float32),
        grid=(N // B,),
        in_specs=[
            pl.BlockSpec((MB, K3), lambda i: (i, 0)),
            pl.BlockSpec((K3, WC), lambda i: (0, 0)),
            pl.BlockSpec((1, WC), lambda i: (0, 0)),
            pl.BlockSpec((1, WC), lambda i: (0, 0)),
        ],
        out_specs=pl.BlockSpec((MB, WC), lambda i: (i, 0)),
        compiler_params=pltpu.CompilerParams(
            dimension_semantics=("parallel",)),
    )(x3, w_flat, scale_t, shift_t)

    y_nhwc = y_flat.reshape(N, H, W, Cout)
    return jnp.transpose(y_nhwc, (0, 3, 1, 2))      # back to NCHW


if __name__ == "__main__":
    N, Cin, H, W = 2, 4, 16, 16
    Cout = 8

    key = jax.random.PRNGKey(0)
    kx, kw, kb = jax.random.split(key, 3)
    x = jax.random.normal(kx, (N, Cin, H, W), jnp.float32)
    w = jax.random.normal(kw, (Cout, Cin, 3, 3), jnp.float32) * 0.1
    b = jax.random.normal(kb, (Cout,), jnp.float32) * 0.1
    gamma = jnp.ones((Cout,), jnp.float32)    # nn.BatchNorm2d default weight
    beta = jnp.zeros((Cout,), jnp.float32)    # nn.BatchNorm2d default bias

    y = jax.jit(conv_block)(x, w, b, gamma, beta)
    jax.block_until_ready(y)

    # Pure-JAX reference (includes the conv bias — it must cancel under BN).
    # Inputs/weights rounded to bf16 like the kernel's MXU inputs; math in f32.
    xb = x.astype(jnp.bfloat16).astype(jnp.float32)
    wb = w.astype(jnp.bfloat16).astype(jnp.float32)
    y_conv = jax.lax.conv_general_dilated(
        xb, wb, window_strides=(1, 1), padding="SAME",
        dimension_numbers=("NCHW", "OIHW", "NCHW"),
        precision=jax.lax.Precision.HIGHEST) + b.reshape(1, Cout, 1, 1)
    mean = jnp.mean(y_conv, axis=(0, 2, 3), keepdims=True)
    var = jnp.mean((y_conv - mean) ** 2, axis=(0, 2, 3), keepdims=True)
    y_ref = jnp.maximum(
        (y_conv - mean) * jax.lax.rsqrt(var + BN_EPS)
        * gamma.reshape(1, Cout, 1, 1) + beta.reshape(1, Cout, 1, 1),
        0.0)

    assert y.shape == (N, Cout, H, W)
    assert jnp.allclose(y, y_ref, atol=1e-3, rtol=1e-3), "mismatch vs reference"
    print("KERNEL_OK")
</pallas_src>

<mosaic_0001>
module attributes {stable_mosaic.version = 11 : i64} {
  func.func @_stats_kernel(%arg0: i32, %arg1: i32, %arg2: memref<32x216xbf16, #tpu.memory_space<vmem>>, %arg3: memref<216x128xbf16, #tpu.memory_space<vmem>>, %arg4: memref<1x8x128xf32, #tpu.memory_space<vmem>>, %arg5: memref<1x8x128xf32, #tpu.memory_space<vmem>>) attributes {dimension_semantics = [#tpu.dimension_semantics<parallel>, #tpu.dimension_semantics<arbitrary>], iteration_bounds = array<i64: 1, 1>, scalar_prefetch = 0 : i64, scratch_operands = 0 : i64, tpu.core_type = #tpu.core_type<tc>, window_params = [{transform_indices = @transform_0, window_bounds = array<i64: 32, 216>}, {pipeline_mode = #tpu.pipeline_mode<synchronous>, transform_indices = @transform_1, window_bounds = array<i64: 216, 128>}, {transform_indices = @transform_2, window_bounds = array<i64: 1, 8, 128>}, {transform_indices = @transform_3, window_bounds = array<i64: 1, 8, 128>}]} {
    %c0_i32 = arith.constant 0 : i32
    %0 = arith.cmpi eq, %arg1, %c0_i32 : i32
    %1 = arith.extui %0 : i1 to i32
    %c0_i32_0 = arith.constant 0 : i32
    %2 = arith.cmpi ne, %1, %c0_i32_0 : i32
    scf.if %2 {
      %cst_18 = arith.constant 0.000000e+00 : f32
      %18 = vector.broadcast %cst_18 : f32 to vector<1x8x128xf32>
      %c0_19 = arith.constant 0 : index
      %c0_20 = arith.constant 0 : index
      %c0_21 = arith.constant 0 : index
      %19 = vector.load %arg4[%c0_19, %c0_20, %c0_21] : memref<1x8x128xf32, #tpu.memory_space<vmem>>, vector<1x8x128xf32>
      tpu.vector_store %arg4[%c0_19, %c0_20, %c0_21], %18 {strides = array<i32>} : memref<1x8x128xf32, #tpu.memory_space<vmem>>, vector<1x8x128xf32>,
      %cst_22 = arith.constant 0.000000e+00 : f32
      %20 = vector.broadcast %cst_22 : f32 to vector<1x8x128xf32>
      %c0_23 = arith.constant 0 : index
      %c0_24 = arith.constant 0 : index
      %c0_25 = arith.constant 0 : index
      %21 = vector.load %arg5[%c0_23, %c0_24, %c0_25] : memref<1x8x128xf32, #tpu.memory_space<vmem>>, vector<1x8x128xf32>
      tpu.vector_store %arg5[%c0_23, %c0_24, %c0_25], %20 {strides = array<i32>} : memref<1x8x128xf32, #tpu.memory_space<vmem>>, vector<1x8x128xf32>,
    } else {
    }
    %c0 = arith.constant 0 : index
    %c0_1 = arith.constant 0 : index
    %3 = vector.load %arg2[%c0, %c0_1] : memref<32x216xbf16, #tpu.memory_space<vmem>>, vector<32x216xbf16>
    %c0_2 = arith.constant 0 : index
    %c0_3 = arith.constant 0 : index
    %4 = vector.load %arg3[%c0_2, %c0_3] : memref<216x128xbf16, #tpu.memory_space<vmem>>, vector<216x128xbf16>
    %cst = arith.constant dense<0.000000e+00> : vector<32x128xf32>
    %5 = tpu.matmul %3, %4, %cst {dimension_numbers = #tpu.dot_dimension_numbers<[1], [0], [0], [1], [0, 0, 1, 1], [], []>} : vector<32x216xbf16>, vector<216x128xbf16>, vector<32x128xf32> -> vector<32x128xf32>
    %6 = vector.shape_cast %5 : vector<32x128xf32> to vector<4x8x128xf32>
    %c0_4 = arith.constant 0 : index
    %c0_5 = arith.constant 0 : index
    %c0_6 = arith.constant 0 : index
    %7 = vector.load %arg4[%c0_4, %c0_5, %c0_6] : memref<1x8x128xf32, #tpu.memory_space<vmem>>, vector<1x8x128xf32>
    %cst_7 = arith.constant dense<0.000000e+00> : vector<8x128xf32>
    %8 = vector.multi_reduction <add>, %6, %cst_7 [0] : vector<4x8x128xf32> to vector<8x128xf32>
    %9 = vector.shape_cast %8 : vector<8x128xf32> to vector<1x8x128xf32>
    %10 = arith.addf %7, %9 : vector<1x8x128xf32>
    %c0_8 = arith.constant 0 : index
    %c0_9 = arith.constant 0 : index
    %c0_10 = arith.constant 0 : index
    %11 = vector.load %arg4[%c0_8, %c0_9, %c0_10] : memref<1x8x128xf32, #tpu.memory_space<vmem>>, vector<1x8x128xf32>
    tpu.vector_store %arg4[%c0_8, %c0_9, %c0_10], %10 {strides = array<i32>} : memref<1x8x128xf32, #tpu.memory_space<vmem>>, vector<1x8x128xf32>,
    %c0_11 = arith.constant 0 : index
    %c0_12 = arith.constant 0 : index
    %c0_13 = arith.constant 0 : index
    %12 = vector.load %arg5[%c0_11, %c0_12, %c0_13] : memref<1x8x128xf32, #tpu.memory_space<vmem>>, vector<1x8x128xf32>
    %13 = arith.mulf %6, %6 : vector<4x8x128xf32>
    %cst_14 = arith.constant dense<0.000000e+00> : vector<8x128xf32>
    %14 = vector.multi_reduction <add>, %13, %cst_14 [0] : vector<4x8x128xf32> to vector<8x128xf32>
    %15 = vector.shape_cast %14 : vector<8x128xf32> to vector<1x8x128xf32>
    %16 = arith.addf %12, %15 : vector<1x8x128xf32>
    %c0_15 = arith.constant 0 : index
    %c0_16 = arith.constant 0 : index
    %c0_17 = arith.constant 0 : index
    %17 = vector.load %arg5[%c0_15, %c0_16, %c0_17] : memref<1x8x128xf32, #tpu.memory_space<vmem>>, vector<1x8x128xf32>
    tpu.vector_store %arg5[%c0_15, %c0_16, %c0_17], %16 {strides = array<i32>} : memref<1x8x128xf32, #tpu.memory_space<vmem>>, vector<1x8x128xf32>,
    return
  }
  func.func @transform_0(%arg0: i32, %arg1: i32) -> (i32, i32) {
    %c1_i32 = arith.constant 1 : i32
    %0 = arith.muli %arg0, %c1_i32 : i32
    %1 = arith.addi %0, %arg1 : i32
    %c0_i32 = arith.constant 0 : i32
    %c0_i32_0 = arith.constant 0 : i32
    return %1, %c0_i32 : i32, i32
  }
  func.func @transform_1(%arg0: i32, %arg1: i32) -> (i32, i32) {
    %c0_i32 = arith.constant 0 : i32
    %c0_i32_0 = arith.constant 0 : i32
    %c0_i32_1 = arith.constant 0 : i32
    return %c0_i32, %c0_i32_0 : i32, i32
  }
  func.func @transform_2(%arg0: i32, %arg1: i32) -> (i32, i32, i32) {
    %c0_i32 = arith.constant 0 : i32
    %c0_i32_0 = arith.constant 0 : i32
    %c0_i32_1 = arith.constant 0 : i32
    return %arg0, %c0_i32, %c0_i32_0 : i32, i32, i32
  }
  func.func @transform_3(%arg0: i32, %arg1: i32) -> (i32, i32, i32) {
    %c0_i32 = arith.constant 0 : i32
    %c0_i32_0 = arith.constant 0 : i32
    %c0_i32_1 = arith.constant 0 : i32
    return %arg0, %c0_i32, %c0_i32_0 : i32, i32, i32
  }
}

module attributes {stable_mosaic.version = 11 : i64} {
  func.func @_conv_bn_relu_kernel(%arg0: i32, %arg1: memref<32x216xbf16, #tpu.memory_space<vmem>>, %arg2: memref<216x128xbf16, #tpu.memory_space<vmem>>, %arg3: memref<1x128xf32, #tpu.memory_space<vmem>>, %arg4: memref<1x128xf32, #tpu.memory_space<vmem>>, %arg5: memref<32x128xf32, #tpu.memory_space<vmem>>) attributes {dimension_semantics = [#tpu.dimension_semantics<parallel>], iteration_bounds = array<i64: 1>, scalar_prefetch = 0 : i64, scratch_operands = 0 : i64, tpu.core_type = #tpu.core_type<tc>, window_params = [{transform_indices = @transform_0, window_bounds = array<i64: 32, 216>}, {pipeline_mode = #tpu.pipeline_mode<synchronous>, transform_indices = @transform_1, window_bounds = array<i64: 216, 128>}, {pipeline_mode = #tpu.pipeline_mode<synchronous>, transform_indices = @transform_2, window_bounds = array<i64: 1, 128>}, {pipeline_mode = #tpu.pipeline_mode<synchronous>, transform_indices = @transform_3, window_bounds = array<i64: 1, 128>}, {transform_indices = @transform_4, window_bounds = array<i64: 32, 128>}]} {
    %c0 = arith.constant 0 : index
    %c0_0 = arith.constant 0 : index
    %0 = vector.load %arg1[%c0, %c0_0] : memref<32x216xbf16, #tpu.memory_space<vmem>>, vector<32x216xbf16>
    %c0_1 = arith.constant 0 : index
    %c0_2 = arith.constant 0 : index
    %1 = vector.load %arg2[%c0_1, %c0_2] : memref<216x128xbf16, #tpu.memory_space<vmem>>, vector<216x128xbf16>
    %cst = arith.constant dense<0.000000e+00> : vector<32x128xf32>
    %2 = tpu.matmul %0, %1, %cst {dimension_numbers = #tpu.dot_dimension_numbers<[1], [0], [0], [1], [0, 0, 1, 1], [], []>} : vector<32x216xbf16>, vector<216x128xbf16>, vector<32x128xf32> -> vector<32x128xf32>
    %c0_3 = arith.constant 0 : index
    %c0_4 = arith.constant 0 : index
    %3 = vector.load %arg3[%c0_3, %c0_4] : memref<1x128xf32, #tpu.memory_space<vmem>>, vector<1x128xf32>
    %4 = vector.broadcast %3 : vector<1x128xf32> to vector<32x128xf32>
    %5 = arith.mulf %2, %4 : vector<32x128xf32>
    %c0_5 = arith.constant 0 : index
    %c0_6 = arith.constant 0 : index
    %6 = vector.load %arg4[%c0_5, %c0_6] : memref<1x128xf32, #tpu.memory_space<vmem>>, vector<1x128xf32>
    %7 = vector.broadcast %6 : vector<1x128xf32> to vector<32x128xf32>
    %8 = arith.addf %5, %7 : vector<32x128xf32>
    %cst_7 = arith.constant 0.000000e+00 : f32
    %9 = vector.broadcast %cst_7 : f32 to vector<32x128xf32>
    %10 = arith.maximumf %8, %9 : vector<32x128xf32>
    %c0_8 = arith.constant 0 : index
    %c0_9 = arith.constant 0 : index
    %11 = vector.load %arg5[%c0_8, %c0_9] : memref<32x128xf32, #tpu.memory_space<vmem>>, vector<32x128xf32>
    tpu.vector_store %arg5[%c0_8, %c0_9], %10 {strides = array<i32>} : memref<32x128xf32, #tpu.memory_space<vmem>>, vector<32x128xf32>,
    return
  }
  func.func @transform_0(%arg0: i32) -> (i32, i32) {
    %c0_i32 = arith.constant 0 : i32
    %c0_i32_0 = arith.constant 0 : i32
    return %arg0, %c0_i32 : i32, i32
  }
  func.func @transform_1(%arg0: i32) -> (i32, i32) {
    %c0_i32 = arith.constant 0 : i32
    %c0_i32_0 = arith.constant 0 : i32
    %c0_i32_1 = arith.constant 0 : i32
    return %c0_i32, %c0_i32_0 : i32, i32
  }
  func.func @transform_2(%arg0: i32) -> (i32, i32) {
    %c0_i32 = arith.constant 0 : i32
    %c0_i32_0 = arith.constant 0 : i32
    %c0_i32_1 = arith.constant 0 : i32
    return %c0_i32, %c0_i32_0 : i32, i32
  }
  func.func @transform_3(%arg0: i32) -> (i32, i32) {
    %c0_i32 = arith.constant 0 : i32
    %c0_i32_0 = arith.constant 0 : i32
    %c0_i32_1 = arith.constant 0 : i32
    return %c0_i32, %c0_i32_0 : i32, i32
  }
  func.func @transform_4(%arg0: i32) -> (i32, i32) {
    %c0_i32 = arith.constant 0 : i32
    %c0_i32_0 = arith.constant 0 : i32
    return %arg0, %c0_i32 : i32, i32
  }
}

</mosaic_0001>

<llo_original>
// kernel: tile.13
$region0: #{tile.13}
  #allocation0 [shape = 's32[1]{0}', space=sflag, size = 0x4, scoped, tag = 'scoped memory for tile.13']
  %s0 = inlined_call_operand.vmem [shape: f32[8], index: 0, kind: input, shape index: {}]
  %s1 = inlined_call_operand.vmem [shape: f32[16,8], index: 1, kind: output, shape index: {}]
  // Predicated region
  $region2: #{tile.13} parent=0 // pred_check
    _
  $region3: #{tile.13} parent=0 // pred_check_branch
    %3 = sbr.rel (0) target = $region5
  $region4: #{tile.13} parent=0 // pred_region
    _
  $region5: #{tile.13} parent=0 // pred_fallthru
    _
  %v4 = vld [vmem:[%s0] ss:$0 sm:$0xff]
  %5 = vst [vmem:[%s1] sm:$0xff] %v4
  %s6 = scalar_lea.vmem %s1, 8
  %7 = vst [vmem:[%s6] sm:$0xff] %v4

// kernel: tile.14
$region0: #{tile.14}
  %s0 = inlined_call_operand.vmem [shape: f32[16,8], index: 0, kind: input, shape index: {}]
  %s1 = inlined_call_operand.vmem [shape: f32[1,128], index: 1, kind: output, shape index: {}]
  $region1: #{tile.14} parent=0
    #allocation0 [shape = 'u8[4096]{0}', space=vmem, size = 0x1000, scoped, tag = 'scoped mem for output reshape']
    %v2 = vld [vmem:[%s0] sm:$0x1]
    %vm3 = vcmask 64512
    %4 = vst.msk [vmem:[#allocation0] sm:$0x1] %vm3, %v2
    %s5 = scalar_lea.vmem %s0, 15
    %v6 = vld [vmem:[%s5] sm:$0x1]
    %7 = vrot.lane.b32.xlu0 %v6, 120
    %v8 = vpop.permute.xlu0 %7
    %vm9 = vcmask 1048512
    %10 = vst.msk [vmem:[#allocation0] sm:$0x1] %vm9, %v8
    %s11 = scalar_lea.vmem %s0, 14
    %v12 = vld [vmem:[%s11] sm:$0x1]
    %13 = vrot.lane.b32.xlu0 %v12, 112
    %v14 = vpop.permute.xlu0 %13
    %vm15 = vcmask 982912
    %16 = vst.msk [vmem:[#allocation0] sm:$0x1] %vm15, %v14
    %s17 = scalar_lea.vmem %s0, 13
    %v18 = vld [vmem:[%s17] sm:$0x1]
    %19 = vrot.lane.b32.xlu0 %v18, 104
    %v20 = vpop.permute.xlu0 %19
    %vm21 = vcmask 917312
    %22 = vst.msk [vmem:[#allocation0] sm:$0x1] %vm21, %v20
    %s23 = scalar_lea.vmem %s0, 12
    %v24 = vld [vmem:[%s23] sm:$0x1]
    %25 = vrot.lane.b32.xlu0 %v24, 96
    %v26 = vpop.permute.xlu0 %25
    %vm27 = vcmask 851712
    %28 = vst.msk [vmem:[#allocation0] sm:$0x1] %vm27, %v26
    %s29 = scalar_lea.vmem %s0, 11
    %v30 = vld [vmem:[%s29] sm:$0x1]
    %31 = vrot.lane.b32.xlu0 %v30, 88
    %v32 = vpop.permute.xlu0 %31
    %vm33 = vcmask 786112
    %34 = vst.msk [vmem:[#allocation0] sm:$0x1] %vm33, %v32
    %s35 = scalar_lea.vmem %s0, 10
    %v36 = vld [vmem:[%s35] sm:$0x1]
    %37 = vrot.lane.b32.xlu0 %v36, 80
    %v38 = vpop.permute.xlu0 %37
    %vm39 = vcmask 720512
    %40 = vst.msk [vmem:[#allocation0] sm:$0x1] %vm39, %v38
    %s41 = scalar_lea.vmem %s0, 9
    %v42 = vld [vmem:[%s41] sm:$0x1]
    %43 = vrot.lane.b32.xlu0 %v42, 72
    %v44 = vpop.permute.xlu0 %43
    %vm45 = vcmask 654912
    %46 = vst.msk [vmem:[#allocation0] sm:$0x1] %vm45, %v44
    %s47 = scalar_lea.vmem %s0, 8
    %v48 = vld [vmem:[%s47] sm:$0x1]
    %49 = vrot.lane.b32.xlu0 %v48, 64
    %v50 = vpop.permute.xlu0 %49
    %vm51 = vcmask 589312
    %52 = vst.msk [vmem:[#allocation0] sm:$0x1] %vm51, %v50
    %s53 = scalar_lea.vmem %s0, 7
    %v54 = vld [vmem:[%s53] sm:$0x1]
    %55 = vrot.lane.b32.xlu0 %v54, 56
    %v56 = vpop.permute.xlu0 %55
    %vm57 = vcmask 523712
    %58 = vst.msk [vmem:[#allocation0] sm:$0x1] %vm57, %v56
    %s59 = scalar_lea.vmem %s0, 6
    %v60 = vld [vmem:[%s59] sm:$0x1]
    %61 = vrot.lane.b32.xlu0 %v60, 48
    %v62 = vpop.permute.xlu0 %61
    %vm63 = vcmask 458112
    %64 = vst.msk [vmem:[#allocation0] sm:$0x1] %vm63, %v62
    %s65 = scalar_lea.vmem %s0, 5
    %v66 = vld [vmem:[%s65] sm:$0x1]
    %67 = vrot.lane.b32.xlu0 %v66, 40
    %v68 = vpop.permute.xlu0 %67
    %vm69 = vcmask 392512
    %70 = vst.msk [vmem:[#allocation0] sm:$0x1] %vm69, %v68
    %s71 = scalar_lea.vmem %s0, 4
    %v72 = vld [vmem:[%s71] sm:$0x1]
    %73 = vrot.lane.b32.xlu0 %v72, 32
    %v74 = vpop.permute.xlu0 %73
    %vm75 = vcmask 326912
    %76 = vst.msk [vmem:[#allocation0] sm:$0x1] %vm75, %v74
    %s77 = scalar_lea.vmem %s0, 3
    %v78 = vld [vmem:[%s77] sm:$0x1]
    %79 = vrot.lane.b32.xlu0 %v78, 24
    %v80 = vpop.permute.xlu0 %79
    %vm81 = vcmask 261312
    %82 = vst.msk [vmem:[#allocation0] sm:$0x1] %vm81, %v80
    %s83 = scalar_lea.vmem %s0, 2
    %v84 = vld [vmem:[%s83] sm:$0x1]
    %85 = vrot.lane.b32.xlu0 %v84, 16
    %v86 = vpop.permute.xlu0 %85
    %vm87 = vcmask 195712
    %88 = vst.msk [vmem:[#allocation0] sm:$0x1] %vm87, %v86
    %s89 = scalar_lea.vmem %s0, 1
    %v90 = vld [vmem:[%s89] sm:$0x1]
    %91 = vrot.lane.b32.xlu0 %v90, 8
    %v92 = vpop.permute.xlu0 %91
    %vm93 = vcmask 130112
    %94 = vst.msk [vmem:[#allocation0] sm:$0x1] %vm93, %v92
    %s96 = sshllo.u32 0, 1
    %v98 = vld [vmem:[#allocation0] sm:%s96]
    %s99 = sshllo.u32 0, 1
    %100 = vst [vmem:[%s1] sm:%s99] %v98

// kernel: conv_block.2
$region0: #{conv_block.2}
  #allocation0 [shape = 'u32[]', space=smem, size = 0x4, offset = 0x4, fixed_abs, tag = 'smem constant byte address 0x4 - core index']
  #allocation1 [shape = 'u32[144,128]{1,0:T(1,128)}', space=vmem, size = 0x12000, scoped, tag = 'internal scratch']
  %s0 = inlined_call_operand.vmem [shape: bf16[32,216], index: 0, kind: input, shape index: {}]
  %s1 = inlined_call_operand.vmem [shape: bf16[216,128], index: 1, kind: input, shape index: {}]
  %s2 = inlined_call_operand.vmem [shape: f32[1,8,128], index: 2, kind: output, shape index: {0}]
  %s3 = inlined_call_operand.vmem [shape: f32[1,8,128], index: 3, kind: output, shape index: {1}]
  %4 = xla_tuple %s2, %s3
  %s5 = sld [smem:[#allocation0]]
  $region30: #{conv_block.2} parent=0
    _
  %s7 = ssub.s32 1, %s5
  %s8 = scalar_select 0, %s7, %s5
  // Predicated region
  $region2: #{conv_block.2} parent=0 // pred_check
    _
  $region3: #{conv_block.2} parent=0 // pred_check_branch
    %10 = sbr.rel (0) target = $region5
  $region4: #{conv_block.2} parent=0 // pred_region
    %s11 = sadd.s32 0, 0
    %s12 = smul.u32 4, %s11
    %p13 = scmp.lt.s32.totalorder %s12, 3
    %s14 = scalar_select %p13, %s12, 3
    %s15 = smul.addr %s14, 2
    %s16 = smul.addr %s15, 4
    %s17 = scalar_lea.vmem %s0, %s16
    %s18 = sadd.s32 0, 0
    %s19 = smul.u32 4, %s18
  $region5: #{conv_block.2} parent=0 // pred_fallthru
    _
  // Predicated region
  $region6: #{conv_block.2} parent=0 // pred_check
    _
  $region7: #{conv_block.2} parent=0 // pred_check_branch
    %21 = sbr.rel (0) target = $region9
  $region8: #{conv_block.2} parent=0 // pred_region
    _
  $region9: #{conv_block.2} parent=0 // pred_fallthru
    _
  %s22 = sadd.s32 0, 0
  %s23 = smul.u32 4, %s22
  %p24 = scmp.lt.s32.totalorder %s23, 3
  %s25 = scalar_select %p24, %s23, 3
  %s26 = smul.addr %s25, 2
  %s27 = smul.addr %s26, 4
  %s28 = scalar_lea.vmem %s0, %s27
  %s29 = sadd.s32 0, 0
  %s30 = smul.u32 4, %s29
  %p31 = scmp.lt.s32.totalorder %s30, 3
  %s32 = scalar_select %p31, %s30, 3
  %s33 = smul.addr %s32, 2
  %s34 = smul.addr %s33, 4
  %s35 = scalar_lea.vmem %s0, %s34
  %s36 = sadd.s32 0, 0
  %s37 = smul.u32 4, %s36
  %p39 = scmp.eq.s32.totalorder 0, 0
  // Predicated region
  $region10: #{conv_block.2} parent=0 // pred_check
    %p40 = pneg %p39
  $region11: #{conv_block.2} parent=0 // pred_check_branch
    %42 = sbr.rel (%p40) target = $region13
  $region12: #{conv_block.2} parent=0 // pred_region
    %43 = vst [vmem:[%s2] sm:$0xff] 0.0
    %44 = vst [vmem:[%s3] sm:$0xff] 0.0
  $region13: #{conv_block.2} parent=0 // pred_fallthru
    _
  %v45 = vld [vmem:[%s35] sm:$0xff]
  %v46 = vld [vmem:[%s35 + $0x8] sm:$0xff]
  %v47 = vld [vmem:[%s35 + $0x10] sm:$0xff]
  %v48 = vld [vmem:[%s35 + $0x18] sm:$0xff]
  %v49 = vld [vmem:[%s1] sm:$0xf]
  %v50 = vld [vmem:[%s1 + $0x4] sm:$0xf]
  %v51 = vld [vmem:[%s1 + $0x8] sm:$0xf]
  %v52 = vld [vmem:[%s1 + $0xc] sm:$0xf]
  %v53 = vld [vmem:[%s1 + $0x10] sm:$0xf]
  %v54 = vld [vmem:[%s1 + $0x14] sm:$0xf]
  %v55 = vld [vmem:[%s1 + $0x18] sm:$0xf]
  %v56 = vld [vmem:[%s1 + $0x1c] sm:$0xf]
  %v57 = vld [vmem:[%s1 + $0x20] sm:$0xf]
  %v58 = vld [vmem:[%s1 + $0x24] sm:$0xf]
  %v59 = vld [vmem:[%s1 + $0x28] sm:$0xf]
  %v60 = vld [vmem:[%s1 + $0x2c] sm:$0xf]
  %v61 = vld [vmem:[%s1 + $0x30] sm:$0xf]
  %v62 = vld [vmem:[%s1 + $0x34] sm:$0xf]
  %v63 = vld [vmem:[%s1 + $0x38] sm:$0xf]
  %v64 = vld [vmem:[%s1 + $0x3c] sm:$0xf]
  %v65 = vld [vmem:[%s1 + $0x40] sm:$0xf]
  %v66 = vld [vmem:[%s1 + $0x44] sm:$0xf]
  %v67 = vld [vmem:[%s1 + $0x48] sm:$0xf]
  %v68 = vld [vmem:[%s1 + $0x4c] sm:$0xf]
  %v69 = vld [vmem:[%s1 + $0x50] sm:$0xf]
  %v70 = vld [vmem:[%s1 + $0x54] sm:$0xf]
  %v71 = vld [vmem:[%s1 + $0x58] sm:$0xf]
  %v72 = vld [vmem:[%s1 + $0x5c] sm:$0xf]
  %v73 = vld [vmem:[%s1 + $0x60] sm:$0xf]
  %v74 = vld [vmem:[%s1 + $0x64] sm:$0xf]
  %v75 = vld [vmem:[%s1 + $0x68] sm:$0xf]
  %v80 = vunpack.c.l.b16 %v45
  %v81 = vunpack.c.h.b16 %v45
  %v82 = vunpack.c.l.b16 %v46
  %v83 = vunpack.c.h.b16 %v46
  %v84 = vunpack.c.l.b16 %v47
  %v85 = vunpack.c.h.b16 %v47
  %v86 = vunpack.c.l.b16 %v48
  %v87 = vunpack.c.h.b16 %v48
  %v88 = vpack.c.b16 %v82, %v80
  %v89 = vpack.c.b16 %v83, %v81
  %v90 = vpack.c.b16 %v86, %v84
  %v91 = vpack.c.b16 %v87, %v85
  %v121 = vunpack.c.l.b16 %v49
  %v122 = vunpack.c.l.b16 %v50
  %v123 = vunpack.c.l.b16 %v51
  %v124 = vunpack.c.l.b16 %v52
  %v125 = vunpack.c.l.b16 %v53
  %v126 = vunpack.c.l.b16 %v54
  %v127 = vunpack.c.l.b16 %v55
  %v128 = vunpack.c.l.b16 %v56
  %v129 = vunpack.c.l.b16 %v57
  %v130 = vunpack.c.l.b16 %v58
  %v131 = vunpack.c.l.b16 %v59
  %v132 = vunpack.c.l.b16 %v60
  %v133 = vunpack.c.l.b16 %v61
  %v134 = vunpack.c.l.b16 %v62
  %v135 = vunpack.c.l.b16 %v63
  %v136 = vunpack.c.l.b16 %v64
  %v137 = vunpack.c.l.b16 %v65
  %v138 = vunpack.c.l.b16 %v66
  %v139 = vunpack.c.l.b16 %v67
  %v140 = vunpack.c.l.b16 %v68
  %v141 = vunpack.c.l.b16 %v69
  %v142 = vunpack.c.l.b16 %v70
  %v143 = vunpack.c.l.b16 %v71
  %v144 = vunpack.c.l.b16 %v72
  %v145 = vunpack.c.l.b16 %v73
  %v146 = vunpack.c.l.b16 %v74
  %v147 = vunpack.c.l.b16 %v75
  %v148 = vpack.c.b16 %v122, %v121
  %v149 = vpack.c.b16 %v124, %v123
  %v150 = vpack.c.b16 %v126, %v125
  %v151 = vpack.c.b16 %v128, %v127
  %v152 = vpack.c.b16 %v130, %v129
  %v153 = vpack.c.b16 %v132, %v131
  %v154 = vpack.c.b16 %v134, %v133
  %v155 = vpack.c.b16 %v136, %v135
  %v156 = vpack.c.b16 %v138, %v137
  %v157 = vpack.c.b16 %v140, %v139
  %v158 = vpack.c.b16 %v142, %v141
  %v159 = vpack.c.b16 %v144, %v143
  %v160 = vpack.c.b16 %v146, %v145
  %v161 = vpack.c.b16 %v147, %v147
  %vm175 = vcmask 719872
  %v177 = vsel %vm175, %v89, 0
  %v180 = vsel %vm175, %v91, 0
  %vm182 = vcmask 1043456
  %v184 = vsel %vm182, %v161, 0
  %186 = vmatprep.subr.bf16.mxu0 0
  %187 = vmatpush1.bf16.msra.mxu0 %v148
  %188 = vmatprep.subr.bf16.mxu0 0
  %189 = vmatpush1.bf16.msra.mxu0 %v149
  %190 = vmatprep.subr.bf16.mxu0 0
  %191 = vmatpush1.bf16.msra.mxu0 %v150
  %192 = vmatprep.subr.bf16.mxu0 0
  %193 = vmatpush1.bf16.msra.mxu0 %v151
  %194 = vmatprep.subr.bf16.mxu0 0
  %195 = vmatpush1.bf16.msra.mxu0 %v152
  %196 = vmatprep.subr.bf16.mxu0 0
  %197 = vmatpush1.bf16.msra.mxu0 %v153
  %198 = vmatprep.subr.bf16.mxu0 0
  %199 = vmatpush1.bf16.msra.mxu0 %v154
  %200 = vmatprep.subr.bf16.mxu0 0
  %201 = vmatpush1.bf16.msra.mxu0 %v155
  %202 = vmatprep.subr.bf16.mxu0 0
  %203 = vmatpush1.bf16.msra.mxu0 %v156
  %204 = vmatprep.subr.bf16.mxu0 0
  %205 = vmatpush1.bf16.msra.mxu0 %v157
  %206 = vmatprep.subr.bf16.mxu0 0
  %207 = vmatpush1.bf16.msra.mxu0 %v158
  %208 = vmatprep.subr.bf16.mxu0 0
  %209 = vmatpush1.bf16.msra.mxu0 %v159
  %210 = vmatprep.subr.bf16.mxu0 0
  %211 = vmatpush1.bf16.msra.mxu0 %v160
  %212 = vmatprep.subr.bf16.mxu0 0
  %213 = vmatpush1.bf16.msra.mxu0 %v184
  %214 = vmatprep.subr.bf16.mxu0 0
  %215 = vmatpush1.bf16.msra.mxu0 0
  %216 = vmatprep.subr.bf16.mxu0 0
  %217 = vmatpush1.bf16.msra.mxu0 0
  %218 = vmatprep.mubr.bf16.mxu0 %v177
  %219 = vmatmul.mubr.bf16.gmra.mrb[0].mxu0 %v88
  %v220 = vpop.f32.mrb[0].mxu0
  %v221 = vadd.f32 0.0, %v220
  %v222 = vpop.f32.mrb[0].mxu0
  %v223 = vpop.f32.mrb[0].mxu0
  %v224 = vadd.f32 0.0, %v223
  %v225 = vpop.f32.mrb[0].mxu0
  %226 = vmatprep.mubr.bf16.mxu0 %v180
  %227 = vmatmul.mubr.bf16.gmra.mrb[0].mxu0 %v90
  %v228 = vpop.f32.mrb[0].mxu0
  %v229 = vadd.f32 0.0, %v228
  %v230 = vpop.f32.mrb[0].mxu0
  %v231 = vpop.f32.mrb[0].mxu0
  %v232 = vadd.f32 0.0, %v231
  %v233 = vpop.f32.mrb[0].mxu0
  %234 = vdwg.mxu0
  %v235 = vld [vmem:[%s2] sm:$0xff]
  %v236 = vadd.f32 %v221, %v224
  %v237 = vadd.f32 %v236, %v229
  %v238 = vadd.f32 %v237, %v232
  %v239 = vadd.f32 %v235, %v238
  %240 = vst [vmem:[%s2] sm:$0xff] %v239
  %v241 = vld [vmem:[%s3] sm:$0xff]
  %v242 = vmul.f32 %v221, %v221
  %v243 = vmul.f32 %v224, %v224
  %v244 = vmul.f32 %v229, %v229
  %v245 = vmul.f32 %v232, %v232
  %v246 = vadd.f32 %v242, %v243
  %v247 = vadd.f32 %v246, %v244
  %v248 = vadd.f32 %v247, %v245
  %v249 = vadd.f32 %v241, %v248
  %250 = vst [vmem:[%s3] sm:$0xff] %v249
  // Predicated region
  $region14: #{conv_block.2} parent=0 // pred_check
    _
  $region15: #{conv_block.2} parent=0 // pred_check_branch
    %252 = sbr.rel (0) target = $region17
  $region16: #{conv_block.2} parent=0 // pred_region
    _
  $region17: #{conv_block.2} parent=0 // pred_fallthru
    _
  // Predicated region
  $region18: #{conv_block.2} parent=0 // pred_check
    _
  $region19: #{conv_block.2} parent=0 // pred_check_branch
    %254 = sbr.rel (0) target = $region21
  $region20: #{conv_block.2} parent=0 // pred_region
    _
  $region21: #{conv_block.2} parent=0 // pred_fallthru
    _
  // Predicated region
  $region22: #{conv_block.2} parent=0 // pred_check
    _
  $region23: #{conv_block.2} parent=0 // pred_check_branch
    %256 = sbr.rel (0) target = $region25
  $region24: #{conv_block.2} parent=0 // pred_region
    _
  $region25: #{conv_block.2} parent=0 // pred_fallthru
    _
  // Predicated region
  $region26: #{conv_block.2} parent=0 // pred_check
    _
  $region27: #{conv_block.2} parent=0 // pred_check_branch
    %258 = sbr.rel (0) target = $region29
  $region28: #{conv_block.2} parent=0 // pred_region
    _
  $region29: #{conv_block.2} parent=0 // pred_fallthru
    _

// kernel: conv_block.3
$region0: #{conv_block.3}
  #allocation0 [shape = 'u32[]', space=smem, size = 0x4, offset = 0x4, fixed_abs, tag = 'smem constant byte address 0x4 - core index']
  #allocation1 [shape = 'u32[144,128]{1,0:T(1,128)}', space=vmem, size = 0x12000, scoped, tag = 'internal scratch']
  %s0 = inlined_call_operand.vmem [shape: bf16[32,216], index: 0, kind: input, shape index: {}]
  %s1 = inlined_call_operand.vmem [shape: bf16[216,128], index: 1, kind: input, shape index: {}]
  %s2 = inlined_call_operand.vmem [shape: f32[1,128], index: 2, kind: input, shape index: {}]
  %s3 = inlined_call_operand.vmem [shape: f32[1,128], index: 3, kind: input, shape index: {}]
  %s4 = inlined_call_operand.vmem [shape: f32[32,128], index: 4, kind: output, shape index: {}]
  %s5 = sld [smem:[#allocation0]]
  $region26: #{conv_block.3} parent=0
    _
  %s7 = ssub.s32 1, %s5
  %s8 = scalar_select 0, %s7, %s5
  // Predicated region
  $region2: #{conv_block.3} parent=0 // pred_check
    _
  $region3: #{conv_block.3} parent=0 // pred_check_branch
    %10 = sbr.rel (0) target = $region5
  $region4: #{conv_block.3} parent=0 // pred_region
    _
  $region5: #{conv_block.3} parent=0 // pred_fallthru
    _
  // Predicated region
  $region6: #{conv_block.3} parent=0 // pred_check
    _
  $region7: #{conv_block.3} parent=0 // pred_check_branch
    %12 = sbr.rel (0) target = $region9
  $region8: #{conv_block.3} parent=0 // pred_region
    _
  $region9: #{conv_block.3} parent=0 // pred_fallthru
    _
  // Predicated region
  $region10: #{conv_block.3} parent=0 // pred_check
    _
  $region11: #{conv_block.3} parent=0 // pred_check_branch
    %14 = sbr.rel (0) target = $region13
  $region12: #{conv_block.3} parent=0 // pred_region
    _
  $region13: #{conv_block.3} parent=0 // pred_fallthru
    _
  // Predicated region
  $region14: #{conv_block.3} parent=0 // pred_check
    _
  $region15: #{conv_block.3} parent=0 // pred_check_branch
    %16 = sbr.rel (0) target = $region17
  $region16: #{conv_block.3} parent=0 // pred_region
    _
  $region17: #{conv_block.3} parent=0 // pred_fallthru
    _
  %v18 = vld [vmem:[%s0] sm:$0xff]
  %v19 = vld [vmem:[%s0 + $0x8] sm:$0xff]
  %v20 = vld [vmem:[%s0 + $0x10] sm:$0xff]
  %v21 = vld [vmem:[%s0 + $0x18] sm:$0xff]
  %v22 = vld [vmem:[%s1] sm:$0xf]
  %v23 = vld [vmem:[%s1 + $0x4] sm:$0xf]
  %v24 = vld [vmem:[%s1 + $0x8] sm:$0xf]
  %v25 = vld [vmem:[%s1 + $0xc] sm:$0xf]
  %v26 = vld [vmem:[%s1 + $0x10] sm:$0xf]
  %v27 = vld [vmem:[%s1 + $0x14] sm:$0xf]
  %v28 = vld [vmem:[%s1 + $0x18] sm:$0xf]
  %v29 = vld [vmem:[%s1 + $0x1c] sm:$0xf]
  %v30 = vld [vmem:[%s1 + $0x20] sm:$0xf]
  %v31 = vld [vmem:[%s1 + $0x24] sm:$0xf]
  %v32 = vld [vmem:[%s1 + $0x28] sm:$0xf]
  %v33 = vld [vmem:[%s1 + $0x2c] sm:$0xf]
  %v34 = vld [vmem:[%s1 + $0x30] sm:$0xf]
  %v35 = vld [vmem:[%s1 + $0x34] sm:$0xf]
  %v36 = vld [vmem:[%s1 + $0x38] sm:$0xf]
  %v37 = vld [vmem:[%s1 + $0x3c] sm:$0xf]
  %v38 = vld [vmem:[%s1 + $0x40] sm:$0xf]
  %v39 = vld [vmem:[%s1 + $0x44] sm:$0xf]
  %v40 = vld [vmem:[%s1 + $0x48] sm:$0xf]
  %v41 = vld [vmem:[%s1 + $0x4c] sm:$0xf]
  %v42 = vld [vmem:[%s1 + $0x50] sm:$0xf]
  %v43 = vld [vmem:[%s1 + $0x54] sm:$0xf]
  %v44 = vld [vmem:[%s1 + $0x58] sm:$0xf]
  %v45 = vld [vmem:[%s1 + $0x5c] sm:$0xf]
  %v46 = vld [vmem:[%s1 + $0x60] sm:$0xf]
  %v47 = vld [vmem:[%s1 + $0x64] sm:$0xf]
  %v48 = vld [vmem:[%s1 + $0x68] sm:$0xf]
  %v53 = vunpack.c.l.b16 %v18
  %v54 = vunpack.c.h.b16 %v18
  %v55 = vunpack.c.l.b16 %v19
  %v56 = vunpack.c.h.b16 %v19
  %v57 = vunpack.c.l.b16 %v20
  %v58 = vunpack.c.h.b16 %v20
  %v59 = vunpack.c.l.b16 %v21
  %v60 = vunpack.c.h.b16 %v21
  %v61 = vpack.c.b16 %v55, %v53
  %v62 = vpack.c.b16 %v56, %v54
  %v63 = vpack.c.b16 %v59, %v57
  %v64 = vpack.c.b16 %v60, %v58
  %v94 = vunpack.c.l.b16 %v22
  %v95 = vunpack.c.l.b16 %v23
  %v96 = vunpack.c.l.b16 %v24
  %v97 = vunpack.c.l.b16 %v25
  %v98 = vunpack.c.l.b16 %v26
  %v99 = vunpack.c.l.b16 %v27
  %v100 = vunpack.c.l.b16 %v28
  %v101 = vunpack.c.l.b16 %v29
  %v102 = vunpack.c.l.b16 %v30
  %v103 = vunpack.c.l.b16 %v31
  %v104 = vunpack.c.l.b16 %v32
  %v105 = vunpack.c.l.b16 %v33
  %v106 = vunpack.c.l.b16 %v34
  %v107 = vunpack.c.l.b16 %v35
  %v108 = vunpack.c.l.b16 %v36
  %v109 = vunpack.c.l.b16 %v37
  %v110 = vunpack.c.l.b16 %v38
  %v111 = vunpack.c.l.b16 %v39
  %v112 = vunpack.c.l.b16 %v40
  %v113 = vunpack.c.l.b16 %v41
  %v114 = vunpack.c.l.b16 %v42
  %v115 = vunpack.c.l.b16 %v43
  %v116 = vunpack.c.l.b16 %v44
  %v117 = vunpack.c.l.b16 %v45
  %v118 = vunpack.c.l.b16 %v46
  %v119 = vunpack.c.l.b16 %v47
  %v120 = vunpack.c.l.b16 %v48
  %v121 = vpack.c.b16 %v95, %v94
  %v122 = vpack.c.b16 %v97, %v96
  %v123 = vpack.c.b16 %v99, %v98
  %v124 = vpack.c.b16 %v101, %v100
  %v125 = vpack.c.b16 %v103, %v102
  %v126 = vpack.c.b16 %v105, %v104
  %v127 = vpack.c.b16 %v107, %v106
  %v128 = vpack.c.b16 %v109, %v108
  %v129 = vpack.c.b16 %v111, %v110
  %v130 = vpack.c.b16 %v113, %v112
  %v131 = vpack.c.b16 %v115, %v114
  %v132 = vpack.c.b16 %v117, %v116
  %v133 = vpack.c.b16 %v119, %v118
  %v134 = vpack.c.b16 %v120, %v120
  %vm148 = vcmask 719872
  %v150 = vsel %vm148, %v62, 0
  %v153 = vsel %vm148, %v64, 0
  %vm155 = vcmask 1043456
  %v157 = vsel %vm155, %v134, 0
  %159 = vmatprep.subr.bf16.mxu0 0
  %160 = vmatpush1.bf16.msra.mxu0 %v121
  %161 = vmatprep.subr.bf16.mxu0 0
  %162 = vmatpush1.bf16.msra.mxu0 %v122
  %163 = vmatprep.subr.bf16.mxu0 0
  %164 = vmatpush1.bf16.msra.mxu0 %v123
  %165 = vmatprep.subr.bf16.mxu0 0
  %166 = vmatpush1.bf16.msra.mxu0 %v124
  %167 = vmatprep.subr.bf16.mxu0 0
  %168 = vmatpush1.bf16.msra.mxu0 %v125
  %169 = vmatprep.subr.bf16.mxu0 0
  %170 = vmatpush1.bf16.msra.mxu0 %v126
  %171 = vmatprep.subr.bf16.mxu0 0
  %172 = vmatpush1.bf16.msra.mxu0 %v127
  %173 = vmatprep.subr.bf16.mxu0 0
  %174 = vmatpush1.bf16.msra.mxu0 %v128
  %175 = vmatprep.subr.bf16.mxu0 0
  %176 = vmatpush1.bf16.msra.mxu0 %v129
  %177 = vmatprep.subr.bf16.mxu0 0
  %178 = vmatpush1.bf16.msra.mxu0 %v130
  %179 = vmatprep.subr.bf16.mxu0 0
  %180 = vmatpush1.bf16.msra.mxu0 %v131
  %181 = vmatprep.subr.bf16.mxu0 0
  %182 = vmatpush1.bf16.msra.mxu0 %v132
  %183 = vmatprep.subr.bf16.mxu0 0
  %184 = vmatpush1.bf16.msra.mxu0 %v133
  %185 = vmatprep.subr.bf16.mxu0 0
  %186 = vmatpush1.bf16.msra.mxu0 %v157
  %187 = vmatprep.subr.bf16.mxu0 0
  %188 = vmatpush1.bf16.msra.mxu0 0
  %189 = vmatprep.subr.bf16.mxu0 0
  %190 = vmatpush1.bf16.msra.mxu0 0
  %191 = vmatprep.mubr.bf16.mxu0 %v150
  %192 = vmatmul.mubr.bf16.gmra.mrb[0].mxu0 %v61
  %v193 = vpop.f32.mrb[0].mxu0
  %v194 = vadd.f32 0.0, %v193
  %v195 = vpop.f32.mrb[0].mxu0
  %v196 = vpop.f32.mrb[0].mxu0
  %v197 = vadd.f32 0.0, %v196
  %v198 = vpop.f32.mrb[0].mxu0
  %199 = vmatprep.mubr.bf16.mxu0 %v153
  %200 = vmatmul.mubr.bf16.gmra.mrb[0].mxu0 %v63
  %v201 = vpop.f32.mrb[0].mxu0
  %v202 = vadd.f32 0.0, %v201
  %v203 = vpop.f32.mrb[0].mxu0
  %v204 = vpop.f32.mrb[0].mxu0
  %v205 = vadd.f32 0.0, %v204
  %v206 = vpop.f32.mrb[0].mxu0
  %207 = vdwg.mxu0
  %v208 = vld [vmem:[%s2] sm:$0x1]
  %v210 = vlaneseq
  %v211 = vshrl.u32 %v210, 7
  %v212 = vsub.s32 0, %v211
  %v213 = vrot.slane %v208, %v212
  %v215 = vmul.f32 %v194, %v213
  %v216 = vmul.f32 %v197, %v213
  %v217 = vmul.f32 %v202, %v213
  %v218 = vmul.f32 %v205, %v213
  %v219 = vld [vmem:[%s3] sm:$0x1]
  %v221 = vlaneseq
  %v222 = vshrl.u32 %v221, 7
  %v223 = vsub.s32 0, %v222
  %v224 = vrot.slane %v219, %v223
  %v226 = vadd.f32 %v215, %v224
  %v227 = vadd.f32 %v216, %v224
  %v228 = vadd.f32 %v217, %v224
  %v229 = vadd.f32 %v218, %v224
  %v230 = vmax.f32 %v226, 0.0
  %v231 = vmax.f32 %v227, 0.0
  %v232 = vmax.f32 %v228, 0.0
  %v233 = vmax.f32 %v229, 0.0
  %234 = vst [vmem:[%s4] sm:$0xff] %v230
  %235 = vst [vmem:[%s4 + $0x8] sm:$0xff] %v231
  %236 = vst [vmem:[%s4 + $0x10] sm:$0xff] %v232
  %237 = vst [vmem:[%s4 + $0x18] sm:$0xff] %v233
  // Predicated region
  $region18: #{conv_block.3} parent=0 // pred_check
    _
  $region19: #{conv_block.3} parent=0 // pred_check_branch
    %239 = sbr.rel (0) target = $region21
  $region20: #{conv_block.3} parent=0 // pred_region
    _
  $region21: #{conv_block.3} parent=0 // pred_fallthru
    _
  // Predicated region
  $region22: #{conv_block.3} parent=0 // pred_check
    _
  $region23: #{conv_block.3} parent=0 // pred_check_branch
    %241 = sbr.rel (0) target = $region25
  $region24: #{conv_block.3} parent=0 // pred_region
    _
  $region25: #{conv_block.3} parent=0 // pred_fallthru
    _

</llo_original>
